<compile_context>
chip_gen: v7x
topology: tpu7x:2x2x1
jax: 0.10.0
libtpu: 0.0.40
codegen_flags: <defaults>
</compile_context>

<pallas_src>
import functools

import jax
import jax.numpy as jnp
from jax import lax
from jax.experimental import pallas as pl
from jax.experimental.pallas import tpu as pltpu

_FEAT = 48   # 24 + 24, fixed by the module's forward
_HALF = 24


def _round_up(x, m):
    return ((x + m - 1) // m) * m


def _default_config():
    """Per-generation defaults (see header).  Falls back to the conservative
    v7x-style settings if the device kind cannot be determined."""
    try:
        kind = jax.devices()[0].device_kind.lower()
    except Exception:  # pragma: no cover - defensive
        kind = ""
    if ("v5" in kind) or ("v6" in kind):
        # single TensorCore, 128 MiB physical VMEM
        return dict(tile_b=16384, num_slices=1, vmem_limit_bytes=64 * 1024 * 1024)
    # v7x-like (2 TCs, 64 MiB VMEM) or unknown: stay conservative.
    return dict(tile_b=12288, num_slices=2, vmem_limit_bytes=48 * 1024 * 1024)


def _wmse_kernel(o_ref, t_ref, w_ref, partial_ref, acc_ref, *, total_rows):
    """Accumulate sum((output - target)^2 * weights) over one (tile_b, 48) tile."""
    s = pl.program_id(0)          # slice axis ("parallel"; 2-way on v7x)
    i = pl.program_id(1)          # reduction axis within the slice
    n_i = pl.num_programs(1)

    @pl.when(i == 0)
    def _init():
        acc_ref[...] = jnp.zeros_like(acc_ref)

    # Inputs stay in their native dtype in HBM; upcast to f32 in-kernel.
    o = o_ref[...].astype(jnp.float32)            # (tile_b, 48)
    t = t_ref[...].astype(jnp.float32)
    diff = o - t
    sq = diff * diff

    tile_b, feat = sq.shape
    half = feat // 2

    # Per-element weight via a single select: w1 for the first 24 columns,
    # w0 for the last 24.  The column predicate is a tiny (1, feat) iota and
    # the (tile_b, 1) weight columns are lane-broadcast inside the select.
    w = w_ref[...].astype(jnp.float32)            # (tile_b, 2)  [w1 | w0]
    col = lax.broadcasted_iota(jnp.int32, (1, feat), 1)
    w_elem = jnp.where(col < half, w[:, 0:1], w[:, 1:2])          # (tile_b, feat)

    # Row-validity mask for ragged tails and clamped (fully out-of-range)
    # tiles.  NOTE: this select runs BEFORE the cross-row reduction so that
    # garbage rows (possibly NaN/Inf from uninitialized VMEM) never reach it.
    base = (s * n_i + i) * tile_b
    rows = base + lax.broadcasted_iota(jnp.int32, (tile_b, 1), 0)  # (tile_b, 1)
    contrib = jnp.where(rows < total_rows, sq * w_elem, 0.0)       # (tile_b, feat)

    # Cross-row (sublane-axis) reduction into a resident (1, feat) accumulator:
    # tile_b/8 vreg adds + one small sublane tree per step; no cross-lane work,
    # no scalar read-modify-write.
    acc_ref[...] += jnp.sum(contrib, axis=0, keepdims=True)

    @pl.when(i == n_i - 1)
    def _finalize():
        partial_ref[...] = acc_ref[...].reshape(partial_ref.shape)


def weighted_mse_loss(output, target, units, w0, w1, *,
                      tile_b=None, num_slices=None, vmem_limit_bytes=None):
    """output, target: (B, 48); units: (B,) int; w0, w1: (n_units,) -> scalar loss."""
    B, D = output.shape
    assert D == _FEAT, "module forward implies last dim = 24 + 24 = 48"
    assert target.shape == (B, D)

    # Glue kept in XLA (tiny O(B) gather): pack the two per-row weights into a
    # single (B, 2) f32 array -> one small, contiguous DMA stream per tile.
    w_packed = jnp.stack(
        [w1[units].astype(jnp.float32), w0[units].astype(jnp.float32)], axis=-1
    )                                                              # (B, 2)

    cfg = _default_config()
    if tile_b is None:
        tile_b = cfg["tile_b"]
    if num_slices is None:
        num_slices = cfg["num_slices"]
    if vmem_limit_bytes is None:
        vmem_limit_bytes = cfg["vmem_limit_bytes"]

    # Round the row tile to the input dtype's sublane multiple (8 f32, 16 bf16,
    # 32 int8/fp8) and never allocate more rows than the (rounded) batch.
    itemsize = int(jnp.dtype(output.dtype).itemsize)
    mult = max(8, 32 // max(1, itemsize))
    tile_b = max(mult, _round_up(min(int(tile_b), _round_up(B, mult)), mult))

    num_tiles = pl.cdiv(B, tile_b)
    num_slices = max(1, min(int(num_slices), num_tiles))
    tiles_per_slice = pl.cdiv(num_tiles, num_slices)

    # Padded-VMEM estimate (minor dims pad to 128 lanes, f32 upper bound):
    #   2 data inputs x 2 buffers x 512 B/row + weights 2 x 512 B/row = 3 KiB/row.
    est_bytes = tile_b * 128 * 4 * (2 * 2 + 2)
    vmem_limit_bytes = int(min(vmem_limit_bytes, est_bytes + (16 << 20)))

    def data_map(s, i):
        blk = s * tiles_per_slice + i
        # Tiles past the end (possible when num_tiles % num_slices != 0) are
        # clamped to the last block; their rows are masked in-kernel.
        return (jnp.minimum(blk, num_tiles - 1), 0)

    def out_map(s, i):
        return (s, 0, 0)

    kernel = functools.partial(_wmse_kernel, total_rows=B)

    partials = pl.pallas_call(
        kernel,
        out_shape=jax.ShapeDtypeStruct((num_slices, 1, D), jnp.float32),
        grid_spec=pltpu.PrefetchScalarGridSpec(
            num_scalar_prefetch=0,
            grid=(num_slices, tiles_per_slice),
            in_specs=[
                pl.BlockSpec((tile_b, D), data_map),   # output (native dtype)
                pl.BlockSpec((tile_b, D), data_map),   # target (native dtype)
                pl.BlockSpec((tile_b, 2), data_map),   # packed per-row weights
            ],
            out_specs=pl.BlockSpec((1, 1, D), out_map),
            scratch_shapes=[pltpu.VMEM((1, D), jnp.float32)],      # vector accumulator
        ),
        compiler_params=pltpu.CompilerParams(
            dimension_semantics=("parallel", "arbitrary"),
            vmem_limit_bytes=vmem_limit_bytes,
        ),
    )(output, target, w_packed)

    # Finalize in the wrapper: combine per-slice / per-column partials and
    # apply 1/(B*48) once.
    inv_n = 1.0 / float(B * D)
    return jnp.sum(partials) * jnp.float32(inv_n)


def _reference(output, target, units, w0, w1):
    B = output.shape[0]
    w = jnp.concatenate(
        [jnp.broadcast_to(w1[units][:, None], (B, _HALF)),
         jnp.broadcast_to(w0[units][:, None], (B, _HALF))],
        axis=-1,
    )
    diff = output.astype(jnp.float32) - target.astype(jnp.float32)
    return jnp.mean(diff * diff * w)


if __name__ == "__main__":
    key = jax.random.PRNGKey(0)
    k1, k2, k3, k4, k5 = jax.random.split(key, 5)

    B = 36          # deliberately NOT a multiple of the small test tile
    D = _FEAT
    n_units = 4

    w0 = jax.random.uniform(k1, (n_units,), jnp.float32, 0.5, 2.0)
    w1 = jax.random.uniform(k2, (n_units,), jnp.float32, 0.5, 2.0)
    output = jax.random.normal(k3, (B, D), jnp.float32)
    target = jax.random.normal(k4, (B, D), jnp.float32)
    units = jax.random.randint(k5, (B,), 0, n_units, jnp.int32)

    ref = jax.block_until_ready(_reference(output, target, units, w0, w1))

    # Small tiles: multi-tile grid, ragged tail, clamped tile, 2-slice split.
    loss_tiled = jax.block_until_ready(
        weighted_mse_loss(output, target, units, w0, w1, tile_b=8, num_slices=2))
    # Chip-default config (single tile at this toy batch size).
    loss_default = jax.block_until_ready(
        weighted_mse_loss(output, target, units, w0, w1))
    # Native bf16 inputs (upcast happens in-kernel; 16-row sublane rounding).
    out_bf = output.astype(jnp.bfloat16)
    tgt_bf = target.astype(jnp.bfloat16)
    ref_bf = jax.block_until_ready(_reference(out_bf, tgt_bf, units, w0, w1))
    loss_bf = jax.block_until_ready(
        weighted_mse_loss(out_bf, tgt_bf, units, w0, w1, tile_b=16, num_slices=1))

    checks = [
        ("tiled",   loss_tiled,   ref,    1e-5, 1e-6),
        ("default", loss_default, ref,    1e-5, 1e-6),
        ("bf16",    loss_bf,      ref_bf, 1e-4, 1e-5),
    ]
    for name, got, want, rtol, atol in checks:
        if not jnp.allclose(got, want, rtol=rtol, atol=atol):
            raise AssertionError(f"{name} mismatch: pallas={got} ref={want}")

    print("KERNEL_OK")
</pallas_src>

<mosaic_0001>
module attributes {stable_mosaic.version = 11 : i64} {
  func.func @_wmse_kernel(%arg0: i32, %arg1: i32, %arg2: memref<8x48xf32, #tpu.memory_space<vmem>>, %arg3: memref<8x48xf32, #tpu.memory_space<vmem>>, %arg4: memref<8x2xf32, #tpu.memory_space<vmem>>, %arg5: memref<1x1x48xf32, #tpu.memory_space<vmem>>, %arg6: memref<1x48xf32, #tpu.memory_space<vmem>>) attributes {dimension_semantics = [#tpu.dimension_semantics<parallel>, #tpu.dimension_semantics<arbitrary>], iteration_bounds = array<i64: 2, 3>, scalar_prefetch = 0 : i64, scratch_operands = 1 : i64, tpu.core_type = #tpu.core_type<tc>, window_params = [{transform_indices = @transform_0, window_bounds = array<i64: 8, 48>}, {transform_indices = @transform_1, window_bounds = array<i64: 8, 48>}, {transform_indices = @transform_2, window_bounds = array<i64: 8, 2>}, {transform_indices = @transform_3, window_bounds = array<i64: 1, 1, 48>}]} {
    %c0_i32 = arith.constant 0 : i32
    %0 = arith.cmpi eq, %arg1, %c0_i32 : i32
    %1 = arith.extui %0 : i1 to i32
    %c0_i32_0 = arith.constant 0 : i32
    %2 = arith.cmpi ne, %1, %c0_i32_0 : i32
    scf.if %2 {
      %cst_12 = arith.constant 0.000000e+00 : f32
      %41 = vector.broadcast %cst_12 : f32 to vector<1x48xf32>
      %c0_13 = arith.constant 0 : index
      %c0_14 = arith.constant 0 : index
      %42 = vector.load %arg6[%c0_13, %c0_14] : memref<1x48xf32, #tpu.memory_space<vmem>>, vector<1x48xf32>
      tpu.vector_store %arg6[%c0_13, %c0_14], %41 {strides = array<i32>} : memref<1x48xf32, #tpu.memory_space<vmem>>, vector<1x48xf32>,
    } else {
    }
    %c0 = arith.constant 0 : index
    %c0_1 = arith.constant 0 : index
    %3 = vector.load %arg2[%c0, %c0_1] : memref<8x48xf32, #tpu.memory_space<vmem>>, vector<8x48xf32>
    %c0_2 = arith.constant 0 : index
    %c0_3 = arith.constant 0 : index
    %4 = vector.load %arg3[%c0_2, %c0_3] : memref<8x48xf32, #tpu.memory_space<vmem>>, vector<8x48xf32>
    %5 = arith.subf %3, %4 : vector<8x48xf32>
    %6 = arith.mulf %5, %5 : vector<8x48xf32>
    %c0_4 = arith.constant 0 : index
    %c0_5 = arith.constant 0 : index
    %7 = vector.load %arg4[%c0_4, %c0_5] : memref<8x2xf32, #tpu.memory_space<vmem>>, vector<8x2xf32>
    %8 = tpu.iota {dimensions = array<i32: 1>} : vector<1x48xi32>
    %c24_i32 = arith.constant 24 : i32
    %9 = vector.broadcast %c24_i32 : i32 to vector<1x48xi32>
    %10 = arith.cmpi slt, %8, %9 : vector<1x48xi32>
    %11 = vector.extract_strided_slice %7 {offsets = [0, 0], sizes = [8, 1], strides = [1, 1]} : vector<8x2xf32> to vector<8x1xf32>
    %12 = vector.extract_strided_slice %7 {offsets = [0, 1], sizes = [8, 1], strides = [1, 1]} : vector<8x2xf32> to vector<8x1xf32>
    %13 = vector.shape_cast %10 : vector<1x48xi1> to vector<1x48xi1>
    %14 = vector.broadcast %13 : vector<1x48xi1> to vector<8x48xi1>
    %15 = vector.shape_cast %11 : vector<8x1xf32> to vector<8x1xf32>
    %16 = vector.broadcast %15 : vector<8x1xf32> to vector<8x48xf32>
    %17 = vector.shape_cast %12 : vector<8x1xf32> to vector<8x1xf32>
    %18 = vector.broadcast %17 : vector<8x1xf32> to vector<8x48xf32>
    %19 = arith.select %14, %16, %18 : vector<8x48xi1>, vector<8x48xf32>
    %c3_i32 = arith.constant 3 : i32
    %20 = arith.muli %arg0, %c3_i32 : i32
    %21 = arith.addi %20, %arg1 : i32
    %c8_i32 = arith.constant 8 : i32
    %22 = arith.muli %21, %c8_i32 : i32
    %23 = tpu.iota {dimensions = array<i32: 0>} : vector<8x1xi32>
    %24 = vector.broadcast %22 : i32 to vector<8x1xi32>
    %25 = arith.addi %24, %23 : vector<8x1xi32>
    %c36_i32 = arith.constant 36 : i32
    %26 = vector.broadcast %c36_i32 : i32 to vector<8x1xi32>
    %27 = arith.cmpi slt, %25, %26 : vector<8x1xi32>
    %28 = arith.mulf %6, %19 : vector<8x48xf32>
    %cst = arith.constant 0.000000e+00 : f32
    %29 = vector.shape_cast %27 : vector<8x1xi1> to vector<8x1xi1>
    %30 = vector.broadcast %29 : vector<8x1xi1> to vector<8x48xi1>
    %31 = vector.broadcast %cst : f32 to vector<8x48xf32>
    %32 = arith.select %30, %28, %31 : vector<8x48xi1>, vector<8x48xf32>
    %c0_6 = arith.constant 0 : index
    %c0_7 = arith.constant 0 : index
    %33 = vector.load %arg6[%c0_6, %c0_7] : memref<1x48xf32, #tpu.memory_space<vmem>>, vector<1x48xf32>
    %cst_8 = arith.constant dense<0.000000e+00> : vector<48xf32>
    %34 = vector.multi_reduction <add>, %32, %cst_8 [0] : vector<8x48xf32> to vector<48xf32>
    %35 = vector.shape_cast %34 : vector<48xf32> to vector<1x48xf32>
    %36 = arith.addf %33, %35 : vector<1x48xf32>
    %c0_9 = arith.constant 0 : index
    %c0_10 = arith.constant 0 : index
    %37 = vector.load %arg6[%c0_9, %c0_10] : memref<1x48xf32, #tpu.memory_space<vmem>>, vector<1x48xf32>
    tpu.vector_store %arg6[%c0_9, %c0_10], %36 {strides = array<i32>} : memref<1x48xf32, #tpu.memory_space<vmem>>, vector<1x48xf32>,
    %c2_i32 = arith.constant 2 : i32
    %38 = arith.cmpi eq, %arg1, %c2_i32 : i32
    %39 = arith.extui %38 : i1 to i32
    %c0_i32_11 = arith.constant 0 : i32
    %40 = arith.cmpi ne, %39, %c0_i32_11 : i32
    scf.if %40 {
      %c0_12 = arith.constant 0 : index
      %c0_13 = arith.constant 0 : index
      %41 = vector.load %arg6[%c0_12, %c0_13] : memref<1x48xf32, #tpu.memory_space<vmem>>, vector<1x48xf32>
      %42 = vector.shape_cast %41 : vector<1x48xf32> to vector<1x1x48xf32>
      %c0_14 = arith.constant 0 : index
      %c0_15 = arith.constant 0 : index
      %c0_16 = arith.constant 0 : index
      %43 = vector.load %arg5[%c0_14, %c0_15, %c0_16] : memref<1x1x48xf32, #tpu.memory_space<vmem>>, vector<1x1x48xf32>
      tpu.vector_store %arg5[%c0_14, %c0_15, %c0_16], %42 {strides = array<i32>} : memref<1x1x48xf32, #tpu.memory_space<vmem>>, vector<1x1x48xf32>,
    } else {
    }
    return
  }
  func.func @transform_0(%arg0: i32, %arg1: i32) -> (i32, i32) {
    %c3_i32 = arith.constant 3 : i32
    %0 = arith.muli %arg0, %c3_i32 : i32
    %1 = arith.addi %0, %arg1 : i32
    %c4_i32 = arith.constant 4 : i32
    %2 = arith.minsi %1, %c4_i32 : i32
    %c0_i32 = arith.constant 0 : i32
    %c0_i32_0 = arith.constant 0 : i32
    return %2, %c0_i32 : i32, i32
  }
  func.func @transform_1(%arg0: i32, %arg1: i32) -> (i32, i32) {
    %c3_i32 = arith.constant 3 : i32
    %0 = arith.muli %arg0, %c3_i32 : i32
    %1 = arith.addi %0, %arg1 : i32
    %c4_i32 = arith.constant 4 : i32
    %2 = arith.minsi %1, %c4_i32 : i32
    %c0_i32 = arith.constant 0 : i32
    %c0_i32_0 = arith.constant 0 : i32
    return %2, %c0_i32 : i32, i32
  }
  func.func @transform_2(%arg0: i32, %arg1: i32) -> (i32, i32) {
    %c3_i32 = arith.constant 3 : i32
    %0 = arith.muli %arg0, %c3_i32 : i32
    %1 = arith.addi %0, %arg1 : i32
    %c4_i32 = arith.constant 4 : i32
    %2 = arith.minsi %1, %c4_i32 : i32
    %c0_i32 = arith.constant 0 : i32
    %c0_i32_0 = arith.constant 0 : i32
    return %2, %c0_i32 : i32, i32
  }
  func.func @transform_3(%arg0: i32, %arg1: i32) -> (i32, i32, i32) {
    %c0_i32 = arith.constant 0 : i32
    %c0_i32_0 = arith.constant 0 : i32
    %c0_i32_1 = arith.constant 0 : i32
    return %arg0, %c0_i32, %c0_i32_0 : i32, i32, i32
  }
}

</mosaic_0001>

<llo_original>
// kernel: tpu_custom_call.1
$region0: #{tpu_custom_call.1}
  #allocation0 [shape = 'u32[]', space=smem, size = 0x4, offset = 0x4, fixed_abs, tag = 'smem constant byte address 0x4 - core index']
  #allocation1 [shape = 'u32[144,128]{1,0:T(1,128)}', space=vmem, size = 0x12000, scoped, tag = 'internal scratch']
  #allocation2 [shape = 'f32[1,48]{1,0:T(1,128)}', space=vmem, size = 0x200, scoped, tag = 'scratch operand']
  %s0 = inlined_call_operand.vmem [shape: f32[36,48], index: 0, kind: input, shape index: {}]
  %s1 = inlined_call_operand.hbm [shape: f32[36,48], index: 1, kind: input, shape index: {}]
  %s2 = inlined_call_operand.vmem [shape: f32[36,2], index: 2, kind: input, shape index: {}]
  %s3 = inlined_call_operand.hbm [shape: f32[2,1,48], index: 3, kind: output, shape index: {}]
  %s4 = sld [smem:[#allocation0]]
  $region57: #{tpu_custom_call.1} parent=0
    _
  %s6 = ssub.s32 1, %s4
  %s7 = scalar_select 0, %s6, %s4
  $region1: #{tpu_custom_call.1} parent=0
    #allocation3 [shape = 'u8[8192]{0}', space=vmem, size = 0x2000, scoped, tag = 'input window, operand 1']
    #allocation4 [shape = 's32[2]{0}', space=sflag, size = 0x8, scoped, tag = 'scoped memory for tpu_custom_call.1']
    #allocation5 [shape = 's32[2]{0}', space=sflag, size = 0x8, scoped, tag = 'scoped memory for tpu_custom_call.1']
    #allocation6 [shape = 'u8[1024]{0}', space=vmem, size = 0x400, scoped, tag = 'output window, operand 0']
    %8 = vsyncpa [#allocation4], 0
    %s9 = scalar_lea.sflag [#allocation4], 1
    %10 = vsyncpa %s9, 0
    %11 = vsyncpa [#allocation5], 0
    %s12 = scalar_lea.sflag [#allocation5], 1
    %13 = vsyncpa %s12, 0
    loop: start=0, step=1, limit=8
    $region2: #{tpu_custom_call.1} parent=1 // loop_pre_header
      _
    $region3: #{tpu_custom_call.1} parent=1 // loop_header
      %s15 = sphi 0, %s19
      %p16 = scmp.ge.s32.totalorder %s15, 8
      %s22 = sphi 0, %s34
      %s23 = sphi 0, %s30
      %s24 = sphi 0, %s22
      %s25 = sphi 0, %s23
      %s26 = sphi 0, %s24
      %s27 = sphi 0, %s25
      %s45 = sphi 0, %s47
      %s48 = sphi 0, %s45
      %s49 = sphi 0, %s48
      %s65 = sphi 0, %s49
      %s79 = sphi 0, %s81
      %s82 = sphi 0, %s79
      %s83 = sphi 0, %s82
      %s99 = sphi 0, %s83
      %s113 = sphi 0, %s115
      %s116 = sphi 0, %s113
      %s117 = sphi 0, %s116
      %s133 = sphi 0, %s117
      %s139 = sphi 0, %s141
      %s142 = sphi 0, %s139
      %s143 = sphi 0, %s142
      %s159 = sphi 0, %s143
    $region4: #{tpu_custom_call.1} parent=1 // loop_header_branch
      %18 = sbr.rel (%p16) target = $region8
    $region5: #{tpu_custom_call.1} parent=1 // loop_body
      %s20 = ssub.s32 %s15, 1
      %s21 = ssub.s32 %s15, 2
      %s28 = sadd.s32 1, %s23
      %p29 = scmp.ge.s32.totalorder %s28, 3
      %s30 = scalar_select %p29, 0, %s28
      %s31 = sadd.s32 1, %s22
      %s32 = scalar_select %p29, %s31, %s22
      %p33 = scmp.ge.s32.totalorder %s32, 2
      %s34 = scalar_select %p33, 0, %s32
      %s35 = smul.u32 %s22, 3
      %s36 = sadd.s32 %s35, %s23
      %p37 = scmp.lt.s32.totalorder %s36, 4
      %s38 = scalar_select %p37, %s36, 4
      %s39 = smul.u32 %s34, 3
      %s40 = sadd.s32 %s39, %s30
      %p41 = scmp.lt.s32.totalorder %s40, 4
      %s42 = scalar_select %p41, %s40, 4
      %s43 = ssub.s32 %s38, %s42
      %p44 = scmp.eq.s32.totalorder %s43, 0
      %s46 = sadd.s32 %s45, 1
      %s47 = scalar_select %p44, %s45, %s46
      %p50 = pneg %p44
      %p51 = scmp.eq.s32.totalorder %s15, 5
      %p52 = por %p50, %p51
      %p53 = scmp.ne.s32.totalorder %s45, %s48
      %p54 = scmp.eq.s32.totalorder %s15, 0
      %p55 = por %p53, %p54
      %p56 = scmp.ne.s32.totalorder %s45, %s48
      %p57 = scmp.eq.s32.totalorder %s20, 5
      %p58 = por %p56, %p57
      %p59 = scmp.ne.s32.totalorder %s48, %s49
      %p60 = scmp.eq.s32.totalorder %s20, 0
      %p61 = por %p59, %p60
      %p62 = scmp.ne.s32.totalorder %s48, %s49
      %p63 = scmp.eq.s32.totalorder %s21, 5
      %p64 = por %p62, %p63
      %p66 = scmp.ne.s32.totalorder %s49, %s65
      %p67 = scmp.eq.s32.totalorder %s21, 0
      %p68 = por %p66, %p67
      %s69 = smul.u32 %s22, 3
      %s70 = sadd.s32 %s69, %s23
      %p71 = scmp.lt.s32.totalorder %s70, 4
      %s72 = scalar_select %p71, %s70, 4
      %s73 = smul.u32 %s34, 3
      %s74 = sadd.s32 %s73, %s30
      %p75 = scmp.lt.s32.totalorder %s74, 4
      %s76 = scalar_select %p75, %s74, 4
      %s77 = ssub.s32 %s72, %s76
      %p78 = scmp.eq.s32.totalorder %s77, 0
      %s80 = sadd.s32 %s79, 1
      %s81 = scalar_select %p78, %s79, %s80
      %p84 = pneg %p78
      %p85 = scmp.eq.s32.totalorder %s15, 5
      %p86 = por %p84, %p85
      %p87 = scmp.ne.s32.totalorder %s79, %s82
      %p88 = scmp.eq.s32.totalorder %s15, 0
      %p89 = por %p87, %p88
      %p90 = scmp.ne.s32.totalorder %s79, %s82
      %p91 = scmp.eq.s32.totalorder %s20, 5
      %p92 = por %p90, %p91
      %p93 = scmp.ne.s32.totalorder %s82, %s83
      %p94 = scmp.eq.s32.totalorder %s20, 0
      %p95 = por %p93, %p94
      %p96 = scmp.ne.s32.totalorder %s82, %s83
      %p97 = scmp.eq.s32.totalorder %s21, 5
      %p98 = por %p96, %p97
      %p100 = scmp.ne.s32.totalorder %s83, %s99
      %p101 = scmp.eq.s32.totalorder %s21, 0
      %p102 = por %p100, %p101
      %s103 = smul.u32 %s22, 3
      %s104 = sadd.s32 %s103, %s23
      %p105 = scmp.lt.s32.totalorder %s104, 4
      %s106 = scalar_select %p105, %s104, 4
      %s107 = smul.u32 %s34, 3
      %s108 = sadd.s32 %s107, %s30
      %p109 = scmp.lt.s32.totalorder %s108, 4
      %s110 = scalar_select %p109, %s108, 4
      %s111 = ssub.s32 %s106, %s110
      %p112 = scmp.eq.s32.totalorder %s111, 0
      %s114 = sadd.s32 %s113, 1
      %s115 = scalar_select %p112, %s113, %s114
      %p118 = pneg %p112
      %p119 = scmp.eq.s32.totalorder %s15, 5
      %p120 = por %p118, %p119
      %p121 = scmp.ne.s32.totalorder %s113, %s116
      %p122 = scmp.eq.s32.totalorder %s15, 0
      %p123 = por %p121, %p122
      %p124 = scmp.ne.s32.totalorder %s113, %s116
      %p125 = scmp.eq.s32.totalorder %s20, 5
      %p126 = por %p124, %p125
      %p127 = scmp.ne.s32.totalorder %s116, %s117
      %p128 = scmp.eq.s32.totalorder %s20, 0
      %p129 = por %p127, %p128
      %p130 = scmp.ne.s32.totalorder %s116, %s117
      %p131 = scmp.eq.s32.totalorder %s21, 5
      %p132 = por %p130, %p131
      %p134 = scmp.ne.s32.totalorder %s117, %s133
      %p135 = scmp.eq.s32.totalorder %s21, 0
      %p136 = por %p134, %p135
      %s137 = ssub.s32 %s22, %s34
      %p138 = scmp.eq.s32.totalorder %s137, 0
      %s140 = sadd.s32 %s139, 1
      %s141 = scalar_select %p138, %s139, %s140
      %p144 = pneg %p138
      %p145 = scmp.eq.s32.totalorder %s15, 5
      %p146 = por %p144, %p145
      %p147 = scmp.ne.s32.totalorder %s139, %s142
      %p148 = scmp.eq.s32.totalorder %s15, 0
      %p149 = por %p147, %p148
      %p150 = scmp.ne.s32.totalorder %s139, %s142
      %p151 = scmp.eq.s32.totalorder %s20, 5
      %p152 = por %p150, %p151
      %p153 = scmp.ne.s32.totalorder %s142, %s143
      %p154 = scmp.eq.s32.totalorder %s20, 0
      %p155 = por %p153, %p154
      %p156 = scmp.ne.s32.totalorder %s142, %s143
      %p157 = scmp.eq.s32.totalorder %s21, 5
      %p158 = por %p156, %p157
      %p160 = scmp.ne.s32.totalorder %s143, %s159
      %p161 = scmp.eq.s32.totalorder %s21, 0
      %p162 = por %p160, %p161
      %p163 = scmp.le.s32.totalorder 1, %s15
      %p164 = scmp.lt.s32.totalorder %s15, 7
      %p165 = pnand %p163, %p164
      %p166 = pneg %p165
      // Predicated region
      $region9: #{tpu_custom_call.1} parent=5 // pred_check
        _
      $region10: #{tpu_custom_call.1} parent=5 // pred_check_branch
        %168 = sbr.rel (%p165) target = $region12
      $region11: #{tpu_custom_call.1} parent=5 // pred_region
        %s169 = ssub.s32 %s15, 1
      $region12: #{tpu_custom_call.1} parent=5 // pred_fallthru
        _
      %p170 = scmp.lt.s32.totalorder %s15, 6
      // Predicated region
      $region13: #{tpu_custom_call.1} parent=5 // pred_check
        %p171 = pneg %p170
      $region14: #{tpu_custom_call.1} parent=5 // pred_check_branch
        %173 = sbr.rel (%p171) target = $region16
      $region15: #{tpu_custom_call.1} parent=5 // pred_region
        // Predicated region
        $region17: #{tpu_custom_call.1} parent=15 // pred_check
          %p174 = pneg %p55
        $region18: #{tpu_custom_call.1} parent=15 // pred_check_branch
          %176 = sbr.rel (%p174) target = $region20
        $region19: #{tpu_custom_call.1} parent=15 // pred_region
          %s177 = smul.u32 %s22, 3
          %s178 = sadd.s32 %s177, %s23
          %p179 = scmp.lt.s32.totalorder %s178, 4
          %s180 = scalar_select %p179, %s178, 4
          %p181 = scmp.lt.s32.totalorder %s180, 4
          %s182 = scalar_select %p181, %s180, 4
          %s183 = smul.addr %s182, 8
          %s184 = scalar_lea.vmem %s0, %s183
          %s185 = smul.u32 %s22, 3
          %s186 = sadd.s32 %s185, %s23
          %p187 = scmp.lt.s32.totalorder %s186, 4
          %s188 = scalar_select %p187, %s186, 4
        $region20: #{tpu_custom_call.1} parent=15 // pred_fallthru
          _
        // Predicated region
        $region21: #{tpu_custom_call.1} parent=15 // pred_check
          %p189 = pneg %p89
        $region22: #{tpu_custom_call.1} parent=15 // pred_check_branch
          %191 = sbr.rel (%p189) target = $region24
        $region23: #{tpu_custom_call.1} parent=15 // pred_region
          %s192 = sand.u32 %s79, 1
          %s193 = scalar_lea.sflag [#allocation4], %s192
          %s194 = sand.u32 %s79, 1
          %s195 = smul.addr %s194, 8
          %s196 = scalar_lea.vmem [#allocation3], %s195
          %s197 = smul.u32 %s22, 3
          %s198 = sadd.s32 %s197, %s23
          %p199 = scmp.lt.s32.totalorder %s198, 4
          %s200 = scalar_select %p199, %s198, 4
          %s202 = ssub.s32 128, 128
          %203 = vsyncadd %s193, %s202
          %s204 = smul.addr %s200, 128
          %s205 = scalar_lea.hbm %s1, %s204
          %s207 = sshll.u32 %s196, 4
          %s208 = int_to_ptr.vmem [resolvable:$true] %s207
          %210 = dma.hbm_to_vmem [thread:$0]  %s205, 128, %s208, %s193
        $region24: #{tpu_custom_call.1} parent=15 // pred_fallthru
          _
        // Predicated region
        $region25: #{tpu_custom_call.1} parent=15 // pred_check
          %p211 = pneg %p123
        $region26: #{tpu_custom_call.1} parent=15 // pred_check_branch
          %213 = sbr.rel (%p211) target = $region28
        $region27: #{tpu_custom_call.1} parent=15 // pred_region
          %s214 = smul.u32 %s22, 3
          %s215 = sadd.s32 %s214, %s23
          %p216 = scmp.lt.s32.totalorder %s215, 4
          %s217 = scalar_select %p216, %s215, 4
          %p218 = scmp.lt.s32.totalorder %s217, 4
          %s219 = scalar_select %p218, %s217, 4
          %s220 = smul.addr %s219, 8
          %s221 = scalar_lea.vmem %s2, %s220
          %s222 = smul.u32 %s22, 3
          %s223 = sadd.s32 %s222, %s23
          %p224 = scmp.lt.s32.totalorder %s223, 4
          %s225 = scalar_select %p224, %s223, 4
        $region28: #{tpu_custom_call.1} parent=15 // pred_fallthru
          _
      $region16: #{tpu_custom_call.1} parent=5 // pred_fallthru
        _
      %p226 = scmp.le.s32.totalorder 1, %s15
      %p227 = scmp.lt.s32.totalorder %s15, 7
      %p228 = pnand %p226, %p227
      %p229 = pneg %p228
      // Predicated region
      $region29: #{tpu_custom_call.1} parent=5 // pred_check
        _
      $region30: #{tpu_custom_call.1} parent=5 // pred_check_branch
        %231 = sbr.rel (%p228) target = $region32
      $region31: #{tpu_custom_call.1} parent=5 // pred_region
        %s232 = ssub.s32 %s15, 1
        %s233 = sand.u32 %s82, 1
        %s234 = scalar_lea.sflag [#allocation4], %s233
        %s235 = sand.u32 %s82, 1
        %s236 = smul.addr %s235, 8
        %s237 = scalar_lea.vmem [#allocation3], %s236
        // Predicated region
        $region33: #{tpu_custom_call.1} parent=31 // pred_check
          %p238 = pneg %p95
        $region34: #{tpu_custom_call.1} parent=31 // pred_check_branch
          %240 = sbr.rel (%p238) target = $region36
        $region35: #{tpu_custom_call.1} parent=31 // pred_region
          %241 = dma.done %s234, 128
        $region36: #{tpu_custom_call.1} parent=31 // pred_fallthru
          _
        %s242 = smul.u32 %s24, 3
        %s243 = sadd.s32 %s242, %s25
        %p244 = scmp.lt.s32.totalorder %s243, 4
        %s245 = scalar_select %p244, %s243, 4
        %p246 = scmp.lt.s32.totalorder %s245, 4
        %s247 = scalar_select %p246, %s245, 4
        %s248 = smul.addr %s247, 8
        %s249 = scalar_lea.vmem %s0, %s248
        %p250 = pneg %p61
        %p251 = pneg %p58
        %s252 = sand.u32 %s82, 1
        %s253 = scalar_lea.sflag [#allocation4], %s252
        %s254 = sand.u32 %s82, 1
        %s255 = smul.addr %s254, 8
        %s256 = scalar_lea.vmem [#allocation3], %s255
        %p257 = pneg %p95
        %p258 = pneg %p92
        %s259 = smul.u32 %s24, 3
        %s260 = sadd.s32 %s259, %s25
        %p261 = scmp.lt.s32.totalorder %s260, 4
        %s262 = scalar_select %p261, %s260, 4
        %p263 = scmp.lt.s32.totalorder %s262, 4
        %s264 = scalar_select %p263, %s262, 4
        %s265 = smul.addr %s264, 8
        %s266 = scalar_lea.vmem %s2, %s265
        %p267 = pneg %p129
        %p268 = pneg %p126
        %p269 = pneg %p155
        %p270 = pneg %p152
        %s271 = sand.u32 %s142, 1
        %s272 = scalar_lea.sflag [#allocation5], %s271
        %s273 = sand.u32 %s142, 1
        %s274 = scalar_lea.vmem [#allocation6], %s273
        %s275 = smul.u32 %s24, 3
        %s276 = sadd.s32 %s275, %s25
        %p277 = scmp.lt.s32.totalorder %s276, 4
        %s278 = scalar_select %p277, %s276, 4
        %p279 = scmp.lt.s32.totalorder %s278, 4
        %s280 = scalar_select %p279, %s278, 4
        %s281 = smul.addr %s280, 8
        %s282 = scalar_lea.vmem %s0, %s281
        %s283 = smul.u32 %s24, 3
        %s284 = sadd.s32 %s283, %s25
        %p285 = scmp.lt.s32.totalorder %s284, 4
        %s286 = scalar_select %p285, %s284, 4
        %s287 = smul.u32 %s24, 3
        %s288 = sadd.s32 %s287, %s25
        %p289 = scmp.lt.s32.totalorder %s288, 4
        %s290 = scalar_select %p289, %s288, 4
        %s291 = smul.u32 %s24, 3
        %s292 = sadd.s32 %s291, %s25
        %p293 = scmp.lt.s32.totalorder %s292, 4
        %s294 = scalar_select %p293, %s292, 4
        %p295 = scmp.lt.s32.totalorder %s294, 4
        %s296 = scalar_select %p295, %s294, 4
        %s297 = smul.addr %s296, 8
        %s298 = scalar_lea.vmem %s2, %s297
        %s299 = smul.u32 %s24, 3
        %s300 = sadd.s32 %s299, %s25
        %p301 = scmp.lt.s32.totalorder %s300, 4
        %s302 = scalar_select %p301, %s300, 4
        %p303 = scmp.eq.s32.totalorder %s25, 0
        // Predicated region
        $region37: #{tpu_custom_call.1} parent=31 // pred_check
          %p304 = pneg %p303
        $region38: #{tpu_custom_call.1} parent=31 // pred_check_branch
          %306 = sbr.rel (%p304) target = $region40
        $region39: #{tpu_custom_call.1} parent=31 // pred_region
          %vm307 = vcmask 385024
          %308 = vst.msk [vmem:[#allocation2] sm:$0x1] %vm307, 0.0
        $region40: #{tpu_custom_call.1} parent=31 // pred_fallthru
          _
        %v309 = vld [vmem:[%s282] sm:$0xff]
        %v310 = vld [vmem:[%s237] sm:$0xff]
        %v311 = vsub.f32 %v309, %v310
        %v312 = vmul.f32 %v311, %v311
        %v313 = vld [vmem:[%s298] sm:$0xff]
        %v314 = vlaneseq
        %v315 = vand.u32 %v314, 127
        %vm316 = vcmp.lt.s32.totalorder %v315, 24
        %v317 = vsel %vm316, 1, 0
        %vm318 = vcmp.eq.s32.totalorder %v317, 1
        %320 = vset.pattern.permute.xlu0 0
        %321 = vperm.xlu0 %320, %v313
        %v322 = vpop.permute.xlu0 %321
        %324 = vset.pattern.permute.xlu0 1
        %325 = vperm.xlu0 %324, %v313
        %v326 = vpop.permute.xlu0 %325
        %v328 = vsel %vm318, %v322, %v326
        %s329 = smul.u32 %s24, 3
        %s330 = sadd.s32 %s329, %s25
        %s331 = smul.u32 %s330, 8
        %v332 = vlaneseq
        %v333 = vshrl.u32 %v332, 7
        %v334 = vstv %s331
        %v335 = vadd.s32 %v334, %v333
        %vm336 = vcmp.lt.s32.totalorder %v335, 36
        %v337 = vmul.f32 %v312, %v328
        %v338 = vsel %vm336, 1, 0
        %vm339 = vcmp.eq.s32.totalorder %v338, 1
        %v340 = vsel %vm339, %v337, 0.0
        %v341 = vld [vmem:[#allocation2] sm:$0x1]
        %vm342 = vcmask 392192
        %v343 = vsel %vm342, %v340, 0.0
        %v344 = vrot.slane %v343, 4
        %v345 = vadd.f32 %v343, %v344
        %v346 = vrot.slane %v345, 2
        %v347 = vadd.f32 %v345, %v346
        %v348 = vrot.slane %v347, 1
        %v349 = vadd.f32 %v347, %v348
        %v350 = vadd.f32 %v341, %v349
        %vm351 = vcmask 385024
        %352 = vst.msk [vmem:[#allocation2] sm:$0x1] %vm351, %v350
        %p353 = scmp.eq.s32.totalorder %s25, 2
        // Predicated region
        $region41: #{tpu_custom_call.1} parent=31 // pred_check
          %p354 = pneg %p353
        $region42: #{tpu_custom_call.1} parent=31 // pred_check_branch
          %356 = sbr.rel (%p354) target = $region44
        $region43: #{tpu_custom_call.1} parent=31 // pred_region
          %v357 = vld [vmem:[#allocation2] sm:$0x1]
          %358 = vst.msk [vmem:[%s274] sm:$0x1] %vm351, %v357
        $region44: #{tpu_custom_call.1} parent=31 // pred_fallthru
          _
        %s359 = sand.u32 %s142, 1
        %s360 = scalar_lea.sflag [#allocation5], %s359
        %s361 = sand.u32 %s142, 1
        %s362 = scalar_lea.vmem [#allocation6], %s361
        // Predicated region
        $region45: #{tpu_custom_call.1} parent=31 // pred_check
          %p363 = pneg %p152
        $region46: #{tpu_custom_call.1} parent=31 // pred_check_branch
          %365 = sbr.rel (%p363) target = $region48
        $region47: #{tpu_custom_call.1} parent=31 // pred_region
          %s367 = ssub.s32 16, 16
          %368 = vsyncadd %s360, %s367
          %s369 = smul.addr %s24, 16
          %s370 = scalar_lea.hbm %s3, %s369
          %s372 = sshll.u32 %s362, 4
          %s373 = int_to_ptr.vmem [resolvable:$true] %s372
          %375 = dma.vmem_to_hbm [thread:$0]  %s373, 16, %s370, %s360
        $region48: #{tpu_custom_call.1} parent=31 // pred_fallthru
          _
      $region32: #{tpu_custom_call.1} parent=5 // pred_fallthru
        _
      %p376 = scmp.le.s32.totalorder 2, %s15
      // Predicated region
      $region49: #{tpu_custom_call.1} parent=5 // pred_check
        %p377 = pneg %p376
      $region50: #{tpu_custom_call.1} parent=5 // pred_check_branch
        %379 = sbr.rel (%p377) target = $region52
      $region51: #{tpu_custom_call.1} parent=5 // pred_region
        %s380 = ssub.s32 %s15, 2
        // Predicated region
        $region53: #{tpu_custom_call.1} parent=51 // pred_check
          %p381 = pneg %p158
        $region54: #{tpu_custom_call.1} parent=51 // pred_check_branch
          %383 = sbr.rel (%p381) target = $region56
        $region55: #{tpu_custom_call.1} parent=51 // pred_region
          %s384 = sand.u32 %s143, 1
          %s385 = scalar_lea.sflag [#allocation5], %s384
          %s386 = sand.u32 %s143, 1
          %s387 = scalar_lea.vmem [#allocation6], %s386
          %388 = dma.done %s385, 16
        $region56: #{tpu_custom_call.1} parent=51 // pred_fallthru
          _
      $region52: #{tpu_custom_call.1} parent=5 // pred_fallthru
        _
    $region6: #{tpu_custom_call.1} parent=1 // loop_footer
      %s19 = sadd.s32 1, %s15
    $region7: #{tpu_custom_call.1} parent=1 // loop_footer_branch
      %14 = sbr.rel target = $region3
    $region8: #{tpu_custom_call.1} parent=1 // loop_exit
      _
    %389 = vsyncpa [#allocation4], 1
    %s390 = scalar_lea.sflag [#allocation4], 1
    %391 = vsyncpa %s390, 1
    %392 = vsyncpa [#allocation5], 1
    %s393 = scalar_lea.sflag [#allocation5], 1
    %394 = vsyncpa %s393, 1

</llo_original>
